<compile_context>
chip_gen: v5e
topology: v5e:2x2
jax: 0.10.0
libtpu: 0.0.40
codegen_flags: <defaults>
</compile_context>

<pallas_src>
import functools

import jax
import jax.numpy as jnp
from jax.experimental import pallas as pl
from jax.experimental.pallas import tpu as pltpu

LANE = 128          # TPU lane width: pad K / output-feature dims to this
K_CONV = 5 * 5 * 3  # im2col K for Conv2d(3, 64, kernel_size=5)
K_PAD = LANE        # 75 -> 128 (lane-aligned K feeding the MXU)
C_OUT = 64          # conv1 output channels
FEAT = 512          # resnet-layer output feature size (interface into fc)
N_CLS = 8           # Linear(512, 8)


# ----------------------------------------------------------------------------
# Pallas kernel: fully fused forward for ONE image (grid = batch)
# ----------------------------------------------------------------------------
def _fused_forward_kernel(cols_ref, cw_ref, pw_ref, fw_ref, fb_ref, out_ref,
                          *, inv_hw):
    # conv1 as an MXU matmul over the (lane-padded) im2col slab of one image.
    conv = jnp.dot(cols_ref[...], cw_ref[...],
                   preferred_element_type=jnp.float32)            # (oh*ow, 64) f32

    # resnet_layer stand-in, part 1: global average pool over spatial rows.
    feat = jnp.sum(conv, axis=0, keepdims=True) * inv_hw          # (1, 64) f32

    # resnet_layer stand-in, part 2: 64 -> 512 projection + ReLU (f32 epilogue).
    h = jnp.dot(feat.astype(jnp.bfloat16), pw_ref[...],
                preferred_element_type=jnp.float32)               # (1, 512) f32
    h = jnp.maximum(h, 0.0)

    # Linear(512, 8), output features zero-padded to 128 lanes; f32 bias add.
    o = jnp.dot(h.astype(jnp.bfloat16), fw_ref[...],
                preferred_element_type=jnp.float32) + fb_ref[...]  # (1, 128) f32
    out_ref[...] = o.reshape(1, 1, LANE).astype(out_ref.dtype)


# ----------------------------------------------------------------------------
# Glue: im2col patch extraction (reshape/slice only; all matmuls run in Pallas)
# TODO(synk): for realistic image sizes, move patch extraction into the kernel
#             (shifted-dot accumulation over a VMEM-resident NHWC tile) to
#             avoid materializing the 25x-expanded slab in HBM.
# ----------------------------------------------------------------------------
def _im2col(x_nhwc, kh, kw, stride, pad):
    x = jnp.pad(x_nhwc, ((0, 0), (pad, pad), (pad, pad), (0, 0)))
    n, hp, wp, c = x.shape
    oh = (hp - kh) // stride + 1
    ow = (wp - kw) // stride + 1
    cols = []
    for i in range(kh):
        for j in range(kw):
            cols.append(x[:, i:i + stride * oh:stride, j:j + stride * ow:stride, :])
    cols = jnp.stack(cols, axis=3)                       # (n, oh, ow, kh*kw, c)
    return cols.reshape(n * oh * ow, kh * kw * c), oh, ow


# ----------------------------------------------------------------------------
# Deterministic parameter init (shapes from Net.__init__) + one-time layout prep
# ----------------------------------------------------------------------------
def init_params(key):
    k1, k2, k3, k4 = jax.random.split(key, 4)
    conv1_w = jax.random.normal(k1, (C_OUT, 3, 5, 5), jnp.float32) * 0.05  # (O,C,KH,KW)
    # TODO(synk): self.resnet_layer is nn.Sequential(*list(model.children())[1:-1])
    # with `model = torch.load('modelcatdog1.pth')` — checkpoint-dependent and not
    # reproducible here; substituted by global-avg-pool + 64->512 ReLU projection
    # that preserves the 512-feature interface into Linear(512, 8).
    proj_w = jax.random.normal(k2, (C_OUT, FEAT), jnp.float32) * 0.05
    fc_w = jax.random.normal(k3, (N_CLS, FEAT), jnp.float32) * 0.03        # PyTorch (out,in)
    fc_b = jax.random.normal(k4, (N_CLS,), jnp.float32) * 0.01
    return conv1_w, proj_w, fc_w, fc_b


def prepare_params(params):
    """One-time, MXU-ready weight layouts (done at init, not per forward)."""
    conv1_w, proj_w, fc_w, fc_b = params
    # conv weight (O,C,KH,KW) -> (KH*KW*C, O), K zero-padded 75 -> 128, bf16.
    cw = jnp.transpose(conv1_w, (2, 3, 1, 0)).reshape(K_CONV, C_OUT)
    cw = jnp.pad(cw, ((0, K_PAD - K_CONV), (0, 0))).astype(jnp.bfloat16)
    pw = proj_w.astype(jnp.bfloat16)                                   # (64, 512)
    # fc: y = x @ W.T + b, with the 8 output features padded to 128 lanes.
    fw = jnp.pad(jnp.transpose(fc_w), ((0, 0), (0, LANE - N_CLS))).astype(jnp.bfloat16)
    fb = jnp.pad(fc_b, (0, LANE - N_CLS)).reshape(1, LANE).astype(jnp.float32)
    return cw, pw, fw, fb


# ----------------------------------------------------------------------------
# Forward pass: one fused Pallas kernel, grid over the batch
# ----------------------------------------------------------------------------
def net_forward(x_nchw, prepared):
    cw, pw, fw, fb = prepared
    n = x_nchw.shape[0]
    x = jnp.transpose(x_nchw, (0, 2, 3, 1)).astype(jnp.bfloat16)       # NCHW -> NHWC

    # conv1: Conv2d(3, 64, kernel_size=5, stride=2, padding=2, bias=False)
    cols, oh, ow = _im2col(x, 5, 5, 2, 2)                              # (n*oh*ow, 75)
    cols = jnp.pad(cols, ((0, 0), (0, K_PAD - K_CONV)))                # lane-aligned K
    hw = oh * ow

    kernel = functools.partial(_fused_forward_kernel, inv_hw=1.0 / hw)
    out_padded = pl.pallas_call(
        kernel,
        out_shape=jax.ShapeDtypeStruct((n, 1, LANE), jnp.float32),
        grid=(n,),
        in_specs=[
            pl.BlockSpec((hw, K_PAD), lambda i: (i, 0)),     # per-image im2col slab
            pl.BlockSpec((K_PAD, C_OUT), lambda i: (0, 0)),  # conv weight (resident)
            pl.BlockSpec((C_OUT, FEAT), lambda i: (0, 0)),   # proj weight (resident)
            pl.BlockSpec((FEAT, LANE), lambda i: (0, 0)),    # fc weight   (resident)
            pl.BlockSpec((1, LANE), lambda i: (0, 0)),       # fc bias     (resident)
        ],
        out_specs=pl.BlockSpec((1, 1, LANE), lambda i: (i, 0, 0)),     # lane-dense store
        compiler_params=pltpu.CompilerParams(
            dimension_semantics=("parallel",)),              # megacore across batch
    )(cols, cw, pw, fw, fb)

    return out_padded.reshape(n, LANE)[:, :N_CLS]            # drop lane padding


if __name__ == "__main__":
    key = jax.random.PRNGKey(0)
    kx, kp = jax.random.split(key)
    x = jax.random.normal(kx, (2, 3, 16, 16), jnp.float32)   # small NCHW input
    params = prepare_params(init_params(kp))

    out = jax.jit(net_forward)(x, params)
    out = jax.block_until_ready(out)
    assert out.shape == (2, N_CLS) and out.dtype == jnp.float32
    print("KERNEL_OK")
</pallas_src>

<mosaic_0001>
module attributes {stable_mosaic.version = 11 : i64} {
  func.func @_fused_forward_kernel(%arg0: i32, %arg1: memref<64x128xbf16, #tpu.memory_space<vmem>>, %arg2: memref<128x64xbf16, #tpu.memory_space<vmem>>, %arg3: memref<64x512xbf16, #tpu.memory_space<vmem>>, %arg4: memref<512x128xbf16, #tpu.memory_space<vmem>>, %arg5: memref<1x128xf32, #tpu.memory_space<vmem>>, %arg6: memref<1x1x128xf32, #tpu.memory_space<vmem>>) attributes {dimension_semantics = [#tpu.dimension_semantics<parallel>], iteration_bounds = array<i64: 2>, scalar_prefetch = 0 : i64, scratch_operands = 0 : i64, tpu.core_type = #tpu.core_type<tc>, window_params = [{transform_indices = @transform_0, window_bounds = array<i64: 64, 128>}, {pipeline_mode = #tpu.pipeline_mode<synchronous>, transform_indices = @transform_1, window_bounds = array<i64: 128, 64>}, {pipeline_mode = #tpu.pipeline_mode<synchronous>, transform_indices = @transform_2, window_bounds = array<i64: 64, 512>}, {pipeline_mode = #tpu.pipeline_mode<synchronous>, transform_indices = @transform_3, window_bounds = array<i64: 512, 128>}, {pipeline_mode = #tpu.pipeline_mode<synchronous>, transform_indices = @transform_4, window_bounds = array<i64: 1, 128>}, {transform_indices = @transform_5, window_bounds = array<i64: 1, 1, 128>}]} {
    %c0 = arith.constant 0 : index
    %c0_0 = arith.constant 0 : index
    %0 = vector.load %arg1[%c0, %c0_0] : memref<64x128xbf16, #tpu.memory_space<vmem>>, vector<64x128xbf16>
    %c0_1 = arith.constant 0 : index
    %c0_2 = arith.constant 0 : index
    %1 = vector.load %arg2[%c0_1, %c0_2] : memref<128x64xbf16, #tpu.memory_space<vmem>>, vector<128x64xbf16>
    %cst = arith.constant dense<0.000000e+00> : vector<64x64xf32>
    %2 = tpu.matmul %0, %1, %cst {dimension_numbers = #tpu.dot_dimension_numbers<[1], [0], [0], [1], [0, 0, 1, 1], [], []>} : vector<64x128xbf16>, vector<128x64xbf16>, vector<64x64xf32> -> vector<64x64xf32>
    %cst_3 = arith.constant dense<0.000000e+00> : vector<64xf32>
    %3 = vector.multi_reduction <add>, %2, %cst_3 [0] : vector<64x64xf32> to vector<64xf32>
    %4 = vector.shape_cast %3 : vector<64xf32> to vector<1x64xf32>
    %cst_4 = arith.constant 1.562500e-02 : f32
    %5 = vector.broadcast %cst_4 : f32 to vector<1x64xf32>
    %6 = arith.mulf %4, %5 : vector<1x64xf32>
    %7 = arith.truncf %6 : vector<1x64xf32> to vector<1x64xbf16>
    %c0_5 = arith.constant 0 : index
    %c0_6 = arith.constant 0 : index
    %8 = vector.load %arg3[%c0_5, %c0_6] : memref<64x512xbf16, #tpu.memory_space<vmem>>, vector<64x512xbf16>
    %cst_7 = arith.constant dense<0.000000e+00> : vector<1x512xf32>
    %9 = tpu.matmul %7, %8, %cst_7 {dimension_numbers = #tpu.dot_dimension_numbers<[1], [0], [0], [1], [0, 0, 1, 1], [], []>} : vector<1x64xbf16>, vector<64x512xbf16>, vector<1x512xf32> -> vector<1x512xf32>
    %cst_8 = arith.constant 0.000000e+00 : f32
    %10 = vector.broadcast %cst_8 : f32 to vector<1x512xf32>
    %11 = arith.maximumf %9, %10 : vector<1x512xf32>
    %12 = arith.truncf %11 : vector<1x512xf32> to vector<1x512xbf16>
    %c0_9 = arith.constant 0 : index
    %c0_10 = arith.constant 0 : index
    %13 = vector.load %arg4[%c0_9, %c0_10] : memref<512x128xbf16, #tpu.memory_space<vmem>>, vector<512x128xbf16>
    %cst_11 = arith.constant dense<0.000000e+00> : vector<1x128xf32>
    %14 = tpu.matmul %12, %13, %cst_11 {dimension_numbers = #tpu.dot_dimension_numbers<[1], [0], [0], [1], [0, 0, 1, 1], [], []>} : vector<1x512xbf16>, vector<512x128xbf16>, vector<1x128xf32> -> vector<1x128xf32>
    %c0_12 = arith.constant 0 : index
    %c0_13 = arith.constant 0 : index
    %15 = vector.load %arg5[%c0_12, %c0_13] : memref<1x128xf32, #tpu.memory_space<vmem>>, vector<1x128xf32>
    %16 = arith.addf %14, %15 : vector<1x128xf32>
    %17 = vector.shape_cast %16 : vector<1x128xf32> to vector<1x1x128xf32>
    %c0_14 = arith.constant 0 : index
    %c0_15 = arith.constant 0 : index
    %c0_16 = arith.constant 0 : index
    %18 = vector.load %arg6[%c0_14, %c0_15, %c0_16] : memref<1x1x128xf32, #tpu.memory_space<vmem>>, vector<1x1x128xf32>
    tpu.vector_store %arg6[%c0_14, %c0_15, %c0_16], %17 {strides = array<i32>} : memref<1x1x128xf32, #tpu.memory_space<vmem>>, vector<1x1x128xf32>,
    return
  }
  func.func @transform_0(%arg0: i32) -> (i32, i32) {
    %c0_i32 = arith.constant 0 : i32
    %c0_i32_0 = arith.constant 0 : i32
    return %arg0, %c0_i32 : i32, i32
  }
  func.func @transform_1(%arg0: i32) -> (i32, i32) {
    %c0_i32 = arith.constant 0 : i32
    %c0_i32_0 = arith.constant 0 : i32
    %c0_i32_1 = arith.constant 0 : i32
    return %c0_i32, %c0_i32_0 : i32, i32
  }
  func.func @transform_2(%arg0: i32) -> (i32, i32) {
    %c0_i32 = arith.constant 0 : i32
    %c0_i32_0 = arith.constant 0 : i32
    %c0_i32_1 = arith.constant 0 : i32
    return %c0_i32, %c0_i32_0 : i32, i32
  }
  func.func @transform_3(%arg0: i32) -> (i32, i32) {
    %c0_i32 = arith.constant 0 : i32
    %c0_i32_0 = arith.constant 0 : i32
    %c0_i32_1 = arith.constant 0 : i32
    return %c0_i32, %c0_i32_0 : i32, i32
  }
  func.func @transform_4(%arg0: i32) -> (i32, i32) {
    %c0_i32 = arith.constant 0 : i32
    %c0_i32_0 = arith.constant 0 : i32
    %c0_i32_1 = arith.constant 0 : i32
    return %c0_i32, %c0_i32_0 : i32, i32
  }
  func.func @transform_5(%arg0: i32) -> (i32, i32, i32) {
    %c0_i32 = arith.constant 0 : i32
    %c0_i32_0 = arith.constant 0 : i32
    %c0_i32_1 = arith.constant 0 : i32
    return %arg0, %c0_i32, %c0_i32_0 : i32, i32, i32
  }
}

</mosaic_0001>

<llo_original>
// kernel: net_forward.1
$region0: #{net_forward.1}
  #allocation0 [shape = 'u32[]', space=smem, size = 0x4, offset = 0x4, fixed_abs, tag = 'smem constant byte address 0x4 - core index']
  #allocation1 [shape = 'u32[72,128]{1,0:T(1,128)}', space=vmem, size = 0x9000, scoped, tag = 'internal scratch']
  %s0 = inlined_call_operand.vmem [shape: bf16[128,128], index: 0, kind: input, shape index: {}]
  %s1 = inlined_call_operand.vmem [shape: bf16[128,64], index: 1, kind: input, shape index: {}]
  %s2 = inlined_call_operand.vmem [shape: bf16[64,512], index: 2, kind: input, shape index: {}]
  %s3 = inlined_call_operand.vmem [shape: bf16[512,128], index: 3, kind: input, shape index: {}]
  %s4 = inlined_call_operand.vmem [shape: f32[1,128], index: 4, kind: input, shape index: {}]
  %s5 = inlined_call_operand.hbm [shape: f32[2,1,128], index: 5, kind: output, shape index: {}]
  %s6 = sld [smem:[#allocation0]]
  $region53: #{net_forward.1} parent=0
    _
  %s8 = ssub.s32 1, %s6
  %s9 = scalar_select 0, %s8, %s6
  $region1: #{net_forward.1} parent=0
    #allocation2 [shape = 'u8[1024]{0}', space=vmem, size = 0x400, scoped, tag = 'output window, operand 0']
    #allocation3 [shape = 's32[2]{0}', space=sflag, size = 0x8, scoped, tag = 'scoped memory for net_forward.1']
    %10 = vsyncpa [#allocation3], 0
    %s11 = scalar_lea.sflag [#allocation3], 1
    %12 = vsyncpa %s11, 0
    loop: start=0, step=1, limit=4
    $region2: #{net_forward.1} parent=1 // loop_pre_header
      _
    $region3: #{net_forward.1} parent=1 // loop_header
      %s14 = sphi 0, %s18
      %p15 = scmp.ge.s32.totalorder %s14, 4
      %s24 = sphi 0, %s26
      %s27 = sphi 0, %s24
      %s28 = sphi 0, %s27
      %s44 = sphi 0, %s28
      %s48 = sphi 0, %s48
      %s50 = sphi 0, %s48
      %s51 = sphi 0, %s50
      %s65 = sphi 0, %s51
      %s69 = sphi 0, %s69
      %s71 = sphi 0, %s69
      %s72 = sphi 0, %s71
      %s86 = sphi 0, %s72
      %s90 = sphi 0, %s90
      %s92 = sphi 0, %s90
      %s93 = sphi 0, %s92
      %s107 = sphi 0, %s93
      %s111 = sphi 0, %s111
      %s113 = sphi 0, %s111
      %s114 = sphi 0, %s113
      %s128 = sphi 0, %s114
      %s134 = sphi 0, %s136
      %s137 = sphi 0, %s134
      %s138 = sphi 0, %s137
      %s154 = sphi 0, %s138
    $region4: #{net_forward.1} parent=1 // loop_header_branch
      %17 = sbr.rel (%p15) target = $region8
    $region5: #{net_forward.1} parent=1 // loop_body
      %s19 = ssub.s32 %s14, 1
      %s20 = ssub.s32 %s14, 2
      %s21 = sadd.s32 %s14, 1
      %s22 = ssub.s32 %s14, %s21
      %p23 = scmp.eq.s32.totalorder %s22, 0
      %s25 = sadd.s32 %s24, 1
      %s26 = scalar_select %p23, %s24, %s25
      %p29 = pneg %p23
      %p30 = scmp.eq.s32.totalorder %s14, 1
      %p31 = por %p29, %p30
      %p32 = scmp.ne.s32.totalorder %s24, %s27
      %p33 = scmp.eq.s32.totalorder %s14, 0
      %p34 = por %p32, %p33
      %p35 = scmp.ne.s32.totalorder %s24, %s27
      %p36 = scmp.eq.s32.totalorder %s19, 1
      %p37 = por %p35, %p36
      %p38 = scmp.ne.s32.totalorder %s27, %s28
      %p39 = scmp.eq.s32.totalorder %s19, 0
      %p40 = por %p38, %p39
      %p41 = scmp.ne.s32.totalorder %s27, %s28
      %p42 = scmp.eq.s32.totalorder %s20, 1
      %p43 = por %p41, %p42
      %p45 = scmp.ne.s32.totalorder %s28, %s44
      %p46 = scmp.eq.s32.totalorder %s20, 0
      %p47 = por %p45, %p46
      %s49 = sadd.s32 %s48, 1
      %p52 = scmp.eq.s32.totalorder %s14, 1
      %p53 = scmp.ne.s32.totalorder %s48, %s50
      %p54 = scmp.eq.s32.totalorder %s14, 0
      %p55 = por %p53, %p54
      %p56 = scmp.ne.s32.totalorder %s48, %s50
      %p57 = scmp.eq.s32.totalorder %s19, 1
      %p58 = por %p56, %p57
      %p59 = scmp.ne.s32.totalorder %s50, %s51
      %p60 = scmp.eq.s32.totalorder %s19, 0
      %p61 = por %p59, %p60
      %p62 = scmp.ne.s32.totalorder %s50, %s51
      %p63 = scmp.eq.s32.totalorder %s20, 1
      %p64 = por %p62, %p63
      %p66 = scmp.ne.s32.totalorder %s51, %s65
      %p67 = scmp.eq.s32.totalorder %s20, 0
      %p68 = por %p66, %p67
      %s70 = sadd.s32 %s69, 1
      %p73 = scmp.eq.s32.totalorder %s14, 1
      %p74 = scmp.ne.s32.totalorder %s69, %s71
      %p75 = scmp.eq.s32.totalorder %s14, 0
      %p76 = por %p74, %p75
      %p77 = scmp.ne.s32.totalorder %s69, %s71
      %p78 = scmp.eq.s32.totalorder %s19, 1
      %p79 = por %p77, %p78
      %p80 = scmp.ne.s32.totalorder %s71, %s72
      %p81 = scmp.eq.s32.totalorder %s19, 0
      %p82 = por %p80, %p81
      %p83 = scmp.ne.s32.totalorder %s71, %s72
      %p84 = scmp.eq.s32.totalorder %s20, 1
      %p85 = por %p83, %p84
      %p87 = scmp.ne.s32.totalorder %s72, %s86
      %p88 = scmp.eq.s32.totalorder %s20, 0
      %p89 = por %p87, %p88
      %s91 = sadd.s32 %s90, 1
      %p94 = scmp.eq.s32.totalorder %s14, 1
      %p95 = scmp.ne.s32.totalorder %s90, %s92
      %p96 = scmp.eq.s32.totalorder %s14, 0
      %p97 = por %p95, %p96
      %p98 = scmp.ne.s32.totalorder %s90, %s92
      %p99 = scmp.eq.s32.totalorder %s19, 1
      %p100 = por %p98, %p99
      %p101 = scmp.ne.s32.totalorder %s92, %s93
      %p102 = scmp.eq.s32.totalorder %s19, 0
      %p103 = por %p101, %p102
      %p104 = scmp.ne.s32.totalorder %s92, %s93
      %p105 = scmp.eq.s32.totalorder %s20, 1
      %p106 = por %p104, %p105
      %p108 = scmp.ne.s32.totalorder %s93, %s107
      %p109 = scmp.eq.s32.totalorder %s20, 0
      %p110 = por %p108, %p109
      %s112 = sadd.s32 %s111, 1
      %p115 = scmp.eq.s32.totalorder %s14, 1
      %p116 = scmp.ne.s32.totalorder %s111, %s113
      %p117 = scmp.eq.s32.totalorder %s14, 0
      %p118 = por %p116, %p117
      %p119 = scmp.ne.s32.totalorder %s111, %s113
      %p120 = scmp.eq.s32.totalorder %s19, 1
      %p121 = por %p119, %p120
      %p122 = scmp.ne.s32.totalorder %s113, %s114
      %p123 = scmp.eq.s32.totalorder %s19, 0
      %p124 = por %p122, %p123
      %p125 = scmp.ne.s32.totalorder %s113, %s114
      %p126 = scmp.eq.s32.totalorder %s20, 1
      %p127 = por %p125, %p126
      %p129 = scmp.ne.s32.totalorder %s114, %s128
      %p130 = scmp.eq.s32.totalorder %s20, 0
      %p131 = por %p129, %p130
      %s132 = ssub.s32 %s14, %s21
      %p133 = scmp.eq.s32.totalorder %s132, 0
      %s135 = sadd.s32 %s134, 1
      %s136 = scalar_select %p133, %s134, %s135
      %p139 = pneg %p133
      %p140 = scmp.eq.s32.totalorder %s14, 1
      %p141 = por %p139, %p140
      %p142 = scmp.ne.s32.totalorder %s134, %s137
      %p143 = scmp.eq.s32.totalorder %s14, 0
      %p144 = por %p142, %p143
      %p145 = scmp.ne.s32.totalorder %s134, %s137
      %p146 = scmp.eq.s32.totalorder %s19, 1
      %p147 = por %p145, %p146
      %p148 = scmp.ne.s32.totalorder %s137, %s138
      %p149 = scmp.eq.s32.totalorder %s19, 0
      %p150 = por %p148, %p149
      %p151 = scmp.ne.s32.totalorder %s137, %s138
      %p152 = scmp.eq.s32.totalorder %s20, 1
      %p153 = por %p151, %p152
      %p155 = scmp.ne.s32.totalorder %s138, %s154
      %p156 = scmp.eq.s32.totalorder %s20, 0
      %p157 = por %p155, %p156
      %p158 = scmp.le.s32.totalorder 1, %s14
      %p159 = scmp.lt.s32.totalorder %s14, 3
      %p160 = pnand %p158, %p159
      %p161 = pneg %p160
      // Predicated region
      $region9: #{net_forward.1} parent=5 // pred_check
        _
      $region10: #{net_forward.1} parent=5 // pred_check_branch
        %163 = sbr.rel (%p160) target = $region12
      $region11: #{net_forward.1} parent=5 // pred_region
        %s164 = ssub.s32 %s14, 1
        // Predicated region
        $region13: #{net_forward.1} parent=11 // pred_check
          %p165 = pneg %p61
        $region14: #{net_forward.1} parent=11 // pred_check_branch
          %167 = sbr.rel (%p165) target = $region16
        $region15: #{net_forward.1} parent=11 // pred_region
          _
        $region16: #{net_forward.1} parent=11 // pred_fallthru
          _
        // Predicated region
        $region17: #{net_forward.1} parent=11 // pred_check
          %p168 = pneg %p82
        $region18: #{net_forward.1} parent=11 // pred_check_branch
          %170 = sbr.rel (%p168) target = $region20
        $region19: #{net_forward.1} parent=11 // pred_region
          _
        $region20: #{net_forward.1} parent=11 // pred_fallthru
          _
        // Predicated region
        $region21: #{net_forward.1} parent=11 // pred_check
          %p171 = pneg %p103
        $region22: #{net_forward.1} parent=11 // pred_check_branch
          %173 = sbr.rel (%p171) target = $region24
        $region23: #{net_forward.1} parent=11 // pred_region
          _
        $region24: #{net_forward.1} parent=11 // pred_fallthru
          _
        // Predicated region
        $region25: #{net_forward.1} parent=11 // pred_check
          %p174 = pneg %p124
        $region26: #{net_forward.1} parent=11 // pred_check_branch
          %176 = sbr.rel (%p174) target = $region28
        $region27: #{net_forward.1} parent=11 // pred_region
          _
        $region28: #{net_forward.1} parent=11 // pred_fallthru
          _
      $region12: #{net_forward.1} parent=5 // pred_fallthru
        _
      %p177 = scmp.lt.s32.totalorder %s14, 2
      // Predicated region
      $region29: #{net_forward.1} parent=5 // pred_check
        %p178 = pneg %p177
      $region30: #{net_forward.1} parent=5 // pred_check_branch
        %180 = sbr.rel (%p178) target = $region32
      $region31: #{net_forward.1} parent=5 // pred_region
        // Predicated region
        $region33: #{net_forward.1} parent=31 // pred_check
          %p181 = pneg %p34
        $region34: #{net_forward.1} parent=31 // pred_check_branch
          %183 = sbr.rel (%p181) target = $region36
        $region35: #{net_forward.1} parent=31 // pred_region
          %s184 = smul.u32 8, %s14
          %p185 = scmp.lt.s32.totalorder %s184, 15
          %s186 = scalar_select %p185, %s184, 15
          %s187 = smul.addr %s186, 4
          %s188 = scalar_lea.vmem %s0, %s187
          %s189 = smul.u32 8, %s14
        $region36: #{net_forward.1} parent=31 // pred_fallthru
          _
      $region32: #{net_forward.1} parent=5 // pred_fallthru
        _
      %p190 = scmp.le.s32.totalorder 1, %s14
      %p191 = scmp.lt.s32.totalorder %s14, 3
      %p192 = pnand %p190, %p191
      %p193 = pneg %p192
      // Predicated region
      $region37: #{net_forward.1} parent=5 // pred_check
        _
      $region38: #{net_forward.1} parent=5 // pred_check_branch
        %195 = sbr.rel (%p192) target = $region40
      $region39: #{net_forward.1} parent=5 // pred_region
        %s196 = ssub.s32 %s14, 1
        %s197 = smul.u32 8, %s19
        %p198 = scmp.lt.s32.totalorder %s197, 15
        %s199 = scalar_select %p198, %s197, 15
        %s200 = smul.addr %s199, 4
        %s201 = scalar_lea.vmem %s0, %s200
        %p202 = pneg %p40
        %p203 = pneg %p37
        %p204 = pneg %p61
        %p205 = pneg %p58
        %p206 = pneg %p82
        %p207 = pneg %p79
        %p208 = pneg %p103
        %p209 = pneg %p100
        %p210 = pneg %p124
        %p211 = pneg %p121
        %p212 = pneg %p150
        %p213 = pneg %p147
        %s214 = sand.u32 %s137, 1
        %s215 = scalar_lea.sflag [#allocation3], %s214
        %s216 = sand.u32 %s137, 1
        %s217 = scalar_lea.vmem [#allocation2], %s216
        %s218 = smul.u32 8, %s19
        %p219 = scmp.lt.s32.totalorder %s218, 15
        %s220 = scalar_select %p219, %s218, 15
        %s221 = smul.addr %s220, 4
        %s222 = scalar_lea.vmem %s0, %s221
        %s223 = smul.u32 8, %s19
        %v225 = vld [vmem:[%s222] sm:$0xf]
        %v226 = vld [vmem:[%s222 + $0x4] sm:$0xf]
        %v227 = vld [vmem:[%s222 + $0x8] sm:$0xf]
        %v228 = vld [vmem:[%s222 + $0xc] sm:$0xf]
        %v229 = vld [vmem:[%s222 + $0x10] sm:$0xf]
        %v230 = vld [vmem:[%s222 + $0x14] sm:$0xf]
        %v231 = vld [vmem:[%s222 + $0x18] sm:$0xf]
        %v232 = vld [vmem:[%s222 + $0x1c] sm:$0xf]
        %v233 = vld [vmem:[%s1] sm:$0xf]
        %v234 = vld [vmem:[%s1 + $0x4] sm:$0xf]
        %v235 = vld [vmem:[%s1 + $0x8] sm:$0xf]
        %v236 = vld [vmem:[%s1 + $0xc] sm:$0xf]
        %v237 = vld [vmem:[%s1 + $0x10] sm:$0xf]
        %v238 = vld [vmem:[%s1 + $0x14] sm:$0xf]
        %v239 = vld [vmem:[%s1 + $0x18] sm:$0xf]
        %v240 = vld [vmem:[%s1 + $0x1c] sm:$0xf]
        %v241 = vld [vmem:[%s1 + $0x20] sm:$0xf]
        %v242 = vld [vmem:[%s1 + $0x24] sm:$0xf]
        %v243 = vld [vmem:[%s1 + $0x28] sm:$0xf]
        %v244 = vld [vmem:[%s1 + $0x2c] sm:$0xf]
        %v245 = vld [vmem:[%s1 + $0x30] sm:$0xf]
        %v246 = vld [vmem:[%s1 + $0x34] sm:$0xf]
        %v247 = vld [vmem:[%s1 + $0x38] sm:$0xf]
        %v248 = vld [vmem:[%s1 + $0x3c] sm:$0xf]
        %v257 = vunpack.c.l.b16 %v225
        %v258 = vunpack.c.l.b16 %v226
        %v259 = vunpack.c.l.b16 %v227
        %v260 = vunpack.c.l.b16 %v228
        %v261 = vunpack.c.l.b16 %v229
        %v262 = vunpack.c.l.b16 %v230
        %v263 = vunpack.c.l.b16 %v231
        %v264 = vunpack.c.l.b16 %v232
        %v265 = vpack.c.b16 %v258, %v257
        %v266 = vpack.c.b16 %v260, %v259
        %v267 = vpack.c.b16 %v262, %v261
        %v268 = vpack.c.b16 %v264, %v263
        %v289 = vunpack.c.l.b16 %v233
        %v290 = vunpack.c.l.b16 %v234
        %v291 = vunpack.c.l.b16 %v235
        %v292 = vunpack.c.l.b16 %v236
        %v293 = vunpack.c.l.b16 %v237
        %v294 = vunpack.c.l.b16 %v238
        %v295 = vunpack.c.l.b16 %v239
        %v296 = vunpack.c.l.b16 %v240
        %v297 = vunpack.c.l.b16 %v241
        %v298 = vunpack.c.l.b16 %v242
        %v299 = vunpack.c.l.b16 %v243
        %v300 = vunpack.c.l.b16 %v244
        %v301 = vunpack.c.l.b16 %v245
        %v302 = vunpack.c.l.b16 %v246
        %v303 = vunpack.c.l.b16 %v247
        %v304 = vunpack.c.l.b16 %v248
        %v305 = vpack.c.b16 %v290, %v289
        %v306 = vpack.c.b16 %v292, %v291
        %v307 = vpack.c.b16 %v294, %v293
        %v308 = vpack.c.b16 %v296, %v295
        %v309 = vpack.c.b16 %v298, %v297
        %v310 = vpack.c.b16 %v300, %v299
        %v311 = vpack.c.b16 %v302, %v301
        %v312 = vpack.c.b16 %v304, %v303
        %321 = vmatpush.bf16.msra.mxu0 %v312
        %322 = vmatpush.bf16.msra.mxu0 %v311
        %323 = vmatpush.bf16.msra.mxu0 %v310
        %324 = vmatpush.bf16.msra.mxu0 %v309
        %325 = vmatpush.bf16.msra.mxu0 %v308
        %326 = vmatpush.bf16.msra.mxu0 %v307
        %327 = vmatpush.bf16.msra.mxu0 %v306
        %328 = vmatpush.bf16.msra.mxu0 %v305
        %329 = vmatmul.bf16.gmra.mxu0 %v265
        %v330 = vpop.f32.mrf.mxu0
        %v331 = vadd.f32 0.0, %v330
        %v332 = vpop.f32.mrf.mxu0
        %v333 = vadd.f32 0.0, %v332
        %334 = vmatmul.bf16.gmra.mxu0 %v266
        %v335 = vpop.f32.mrf.mxu0
        %v336 = vadd.f32 0.0, %v335
        %v337 = vpop.f32.mrf.mxu0
        %v338 = vadd.f32 0.0, %v337
        %339 = vmatmul.bf16.gmra.mxu0 %v267
        %v340 = vpop.f32.mrf.mxu0
        %v341 = vadd.f32 0.0, %v340
        %v342 = vpop.f32.mrf.mxu0
        %v343 = vadd.f32 0.0, %v342
        %344 = vmatmul.bf16.gmra.mxu0 %v268
        %v345 = vpop.f32.mrf.mxu0
        %v346 = vadd.f32 0.0, %v345
        %v347 = vpop.f32.mrf.mxu0
        %v348 = vadd.f32 0.0, %v347
        %349 = vdwg.mxu0
        %vm350 = vcmask 523264
        %v351 = vsel %vm350, %v331, 0.0
        %v352 = vsel %vm350, %v333, 0.0
        %v353 = vadd.f32 %v351, %v352
        %v354 = vsel %vm350, %v336, 0.0
        %v355 = vadd.f32 %v353, %v354
        %v356 = vsel %vm350, %v338, 0.0
        %v357 = vadd.f32 %v355, %v356
        %v358 = vsel %vm350, %v341, 0.0
        %v359 = vadd.f32 %v357, %v358
        %v360 = vsel %vm350, %v343, 0.0
        %v361 = vadd.f32 %v359, %v360
        %v362 = vsel %vm350, %v346, 0.0
        %v363 = vadd.f32 %v361, %v362
        %v364 = vsel %vm350, %v348, 0.0
        %v365 = vadd.f32 %v363, %v364
        %v366 = vrot.slane %v365, 4
        %v367 = vadd.f32 %v365, %v366
        %v368 = vrot.slane %v367, 2
        %v369 = vadd.f32 %v367, %v368
        %v370 = vrot.slane %v369, 1
        %v371 = vadd.f32 %v369, %v370
        %v372 = vmul.f32 %v371, 0.015625
        %v373 = vpack.c.bf16 %v372, %v372
        %v374 = vld [vmem:[%s2] sm:$0xff]
        %v375 = vld [vmem:[%s2 + $0x8] sm:$0xff]
        %v376 = vld [vmem:[%s2 + $0x10] sm:$0xff]
        %v377 = vld [vmem:[%s2 + $0x18] sm:$0xff]
        %v378 = vld [vmem:[%s2 + $0x20] sm:$0xff]
        %v379 = vld [vmem:[%s2 + $0x28] sm:$0xff]
        %v380 = vld [vmem:[%s2 + $0x30] sm:$0xff]
        %v381 = vld [vmem:[%s2 + $0x38] sm:$0xff]
        %v382 = vld [vmem:[%s2 + $0x40] sm:$0xff]
        %v383 = vld [vmem:[%s2 + $0x48] sm:$0xff]
        %v384 = vld [vmem:[%s2 + $0x50] sm:$0xff]
        %v385 = vld [vmem:[%s2 + $0x58] sm:$0xff]
        %v386 = vld [vmem:[%s2 + $0x60] sm:$0xff]
        %v387 = vld [vmem:[%s2 + $0x68] sm:$0xff]
        %v388 = vld [vmem:[%s2 + $0x70] sm:$0xff]
        %v389 = vld [vmem:[%s2 + $0x78] sm:$0xff]
        %v406 = vunpack.c.l.b16 %v374
        %v407 = vunpack.c.h.b16 %v374
        %v408 = vunpack.c.l.b16 %v375
        %v409 = vunpack.c.h.b16 %v375
        %v410 = vunpack.c.l.b16 %v376
        %v411 = vunpack.c.h.b16 %v376
        %v412 = vunpack.c.l.b16 %v377
        %v413 = vunpack.c.h.b16 %v377
        %v414 = vunpack.c.l.b16 %v378
        %v415 = vunpack.c.h.b16 %v378
        %v416 = vunpack.c.l.b16 %v379
        %v417 = vunpack.c.h.b16 %v379
        %v418 = vunpack.c.l.b16 %v380
        %v419 = vunpack.c.h.b16 %v380
        %v420 = vunpack.c.l.b16 %v381
        %v421 = vunpack.c.h.b16 %v381
        %v422 = vunpack.c.l.b16 %v382
        %v423 = vunpack.c.h.b16 %v382
        %v424 = vunpack.c.l.b16 %v383
        %v425 = vunpack.c.h.b16 %v383
        %v426 = vunpack.c.l.b16 %v384
        %v427 = vunpack.c.h.b16 %v384
        %v428 = vunpack.c.l.b16 %v385
        %v429 = vunpack.c.h.b16 %v385
        %v430 = vunpack.c.l.b16 %v386
        %v431 = vunpack.c.h.b16 %v386
        %v432 = vunpack.c.l.b16 %v387
        %v433 = vunpack.c.h.b16 %v387
        %v434 = vunpack.c.l.b16 %v388
        %v435 = vunpack.c.h.b16 %v388
        %v436 = vunpack.c.l.b16 %v389
        %v437 = vunpack.c.h.b16 %v389
        %v438 = vpack.c.b16 %v410, %v406
        %v439 = vpack.c.b16 %v411, %v407
        %v440 = vpack.c.b16 %v412, %v408
        %v441 = vpack.c.b16 %v413, %v409
        %v442 = vpack.c.b16 %v418, %v414
        %v443 = vpack.c.b16 %v419, %v415
        %v444 = vpack.c.b16 %v420, %v416
        %v445 = vpack.c.b16 %v421, %v417
        %v446 = vpack.c.b16 %v426, %v422
        %v447 = vpack.c.b16 %v427, %v423
        %v448 = vpack.c.b16 %v428, %v424
        %v449 = vpack.c.b16 %v429, %v425
        %v450 = vpack.c.b16 %v434, %v430
        %v451 = vpack.c.b16 %v435, %v431
        %v452 = vpack.c.b16 %v436, %v432
        %v453 = vpack.c.b16 %v437, %v433
        %v471 = vsel %vm350, %v373, 0
        %473 = vmatpush.bf16.msra.mxu0 0
        %474 = vmatpush.bf16.msra.mxu0 0
        %475 = vmatpush.bf16.msra.mxu0 0
        %476 = vmatpush.bf16.msra.mxu0 0
        %477 = vmatpush.bf16.msra.mxu0 %v450
        %478 = vmatpush.bf16.msra.mxu0 %v446
        %479 = vmatpush.bf16.msra.mxu0 %v442
        %480 = vmatpush.bf16.msra.mxu0 %v438
        %481 = vmatmul.bf16.gmra.mxu0 %v471
        %v482 = vpop.f32.mrf.mxu0
        %v483 = vadd.f32 0.0, %v482
        %v484 = vpop.f32.mrf.mxu0
        %485 = vdwg.mxu0
        %486 = vmatpush.bf16.msra.mxu0 0
        %487 = vmatpush.bf16.msra.mxu0 0
        %488 = vmatpush.bf16.msra.mxu0 0
        %489 = vmatpush.bf16.msra.mxu0 0
        %490 = vmatpush.bf16.msra.mxu0 %v451
        %491 = vmatpush.bf16.msra.mxu0 %v447
        %492 = vmatpush.bf16.msra.mxu0 %v443
        %493 = vmatpush.bf16.msra.mxu0 %v439
        %494 = vmatmul.bf16.gmra.mxu0 %v471
        %v495 = vpop.f32.mrf.mxu0
        %v496 = vadd.f32 0.0, %v495
        %v497 = vpop.f32.mrf.mxu0
        %498 = vdwg.mxu0
        %499 = vmatpush.bf16.msra.mxu0 0
        %500 = vmatpush.bf16.msra.mxu0 0
        %501 = vmatpush.bf16.msra.mxu0 0
        %502 = vmatpush.bf16.msra.mxu0 0
        %503 = vmatpush.bf16.msra.mxu0 %v452
        %504 = vmatpush.bf16.msra.mxu0 %v448
        %505 = vmatpush.bf16.msra.mxu0 %v444
        %506 = vmatpush.bf16.msra.mxu0 %v440
        %507 = vmatmul.bf16.gmra.mxu0 %v471
        %v508 = vpop.f32.mrf.mxu0
        %v509 = vadd.f32 0.0, %v508
        %v510 = vpop.f32.mrf.mxu0
        %511 = vdwg.mxu0
        %512 = vmatpush.bf16.msra.mxu0 0
        %513 = vmatpush.bf16.msra.mxu0 0
        %514 = vmatpush.bf16.msra.mxu0 0
        %515 = vmatpush.bf16.msra.mxu0 0
        %516 = vmatpush.bf16.msra.mxu0 %v453
        %517 = vmatpush.bf16.msra.mxu0 %v449
        %518 = vmatpush.bf16.msra.mxu0 %v445
        %519 = vmatpush.bf16.msra.mxu0 %v441
        %520 = vmatmul.bf16.gmra.mxu0 %v471
        %v521 = vpop.f32.mrf.mxu0
        %v522 = vadd.f32 0.0, %v521
        %v523 = vpop.f32.mrf.mxu0
        %524 = vdwg.mxu0
        %v525 = vmax.f32 %v483, 0.0
        %v526 = vmax.f32 %v496, 0.0
        %v527 = vmax.f32 %v509, 0.0
        %v528 = vmax.f32 %v522, 0.0
        %v529 = vpack.c.bf16 %v525, %v525
        %v530 = vpack.c.bf16 %v526, %v526
        %v531 = vpack.c.bf16 %v527, %v527
        %v532 = vpack.c.bf16 %v528, %v528
        %v533 = vld [vmem:[%s3] sm:$0xf]
        %v534 = vld [vmem:[%s3 + $0x4] sm:$0xf]
        %v535 = vld [vmem:[%s3 + $0x8] sm:$0xf]
        %v536 = vld [vmem:[%s3 + $0xc] sm:$0xf]
        %v537 = vld [vmem:[%s3 + $0x10] sm:$0xf]
        %v538 = vld [vmem:[%s3 + $0x14] sm:$0xf]
        %v539 = vld [vmem:[%s3 + $0x18] sm:$0xf]
        %v540 = vld [vmem:[%s3 + $0x1c] sm:$0xf]
        %v541 = vld [vmem:[%s3 + $0x20] sm:$0xf]
        %v542 = vld [vmem:[%s3 + $0x24] sm:$0xf]
        %v543 = vld [vmem:[%s3 + $0x28] sm:$0xf]
        %v544 = vld [vmem:[%s3 + $0x2c] sm:$0xf]
        %v545 = vld [vmem:[%s3 + $0x30] sm:$0xf]
        %v546 = vld [vmem:[%s3 + $0x34] sm:$0xf]
        %v547 = vld [vmem:[%s3 + $0x38] sm:$0xf]
        %v548 = vld [vmem:[%s3 + $0x3c] sm:$0xf]
        %v549 = vld [vmem:[%s3 + $0x40] sm:$0xf]
        %v550 = vld [vmem:[%s3 + $0x44] sm:$0xf]
        %v551 = vld [vmem:[%s3 + $0x48] sm:$0xf]
        %v552 = vld [vmem:[%s3 + $0x4c] sm:$0xf]
        %v553 = vld [vmem:[%s3 + $0x50] sm:$0xf]
        %v554 = vld [vmem:[%s3 + $0x54] sm:$0xf]
        %v555 = vld [vmem:[%s3 + $0x58] sm:$0xf]
        %v556 = vld [vmem:[%s3 + $0x5c] sm:$0xf]
        %v557 = vld [vmem:[%s3 + $0x60] sm:$0xf]
        %v558 = vld [vmem:[%s3 + $0x64] sm:$0xf]
        %v559 = vld [vmem:[%s3 + $0x68] sm:$0xf]
        %v560 = vld [vmem:[%s3 + $0x6c] sm:$0xf]
        %v561 = vld [vmem:[%s3 + $0x70] sm:$0xf]
        %v562 = vld [vmem:[%s3 + $0x74] sm:$0xf]
        %v563 = vld [vmem:[%s3 + $0x78] sm:$0xf]
        %v564 = vld [vmem:[%s3 + $0x7c] sm:$0xf]
        %v565 = vld [vmem:[%s3 + $0x80] sm:$0xf]
        %v566 = vld [vmem:[%s3 + $0x84] sm:$0xf]
        %v567 = vld [vmem:[%s3 + $0x88] sm:$0xf]
        %v568 = vld [vmem:[%s3 + $0x8c] sm:$0xf]
        %v569 = vld [vmem:[%s3 + $0x90] sm:$0xf]
        %v570 = vld [vmem:[%s3 + $0x94] sm:$0xf]
        %v571 = vld [vmem:[%s3 + $0x98] sm:$0xf]
        %v572 = vld [vmem:[%s3 + $0x9c] sm:$0xf]
        %v573 = vld [vmem:[%s3 + $0xa0] sm:$0xf]
        %v574 = vld [vmem:[%s3 + $0xa4] sm:$0xf]
        %v575 = vld [vmem:[%s3 + $0xa8] sm:$0xf]
        %v576 = vld [vmem:[%s3 + $0xac] sm:$0xf]
        %v577 = vld [vmem:[%s3 + $0xb0] sm:$0xf]
        %v578 = vld [vmem:[%s3 + $0xb4] sm:$0xf]
        %v579 = vld [vmem:[%s3 + $0xb8] sm:$0xf]
        %v580 = vld [vmem:[%s3 + $0xbc] sm:$0xf]
        %v581 = vld [vmem:[%s3 + $0xc0] sm:$0xf]
        %v582 = vld [vmem:[%s3 + $0xc4] sm:$0xf]
        %v583 = vld [vmem:[%s3 + $0xc8] sm:$0xf]
        %v584 = vld [vmem:[%s3 + $0xcc] sm:$0xf]
        %v585 = vld [vmem:[%s3 + $0xd0] sm:$0xf]
        %v586 = vld [vmem:[%s3 + $0xd4] sm:$0xf]
        %v587 = vld [vmem:[%s3 + $0xd8] sm:$0xf]
        %v588 = vld [vmem:[%s3 + $0xdc] sm:$0xf]
        %v589 = vld [vmem:[%s3 + $0xe0] sm:$0xf]
        %v590 = vld [vmem:[%s3 + $0xe4] sm:$0xf]
        %v591 = vld [vmem:[%s3 + $0xe8] sm:$0xf]
        %v592 = vld [vmem:[%s3 + $0xec] sm:$0xf]
        %v593 = vld [vmem:[%s3 + $0xf0] sm:$0xf]
        %v594 = vld [vmem:[%s3 + $0xf4] sm:$0xf]
        %v595 = vld [vmem:[%s3 + $0xf8] sm:$0xf]
        %v596 = vld [vmem:[%s3 + $0xfc] sm:$0xf]
        %v597 = vld [vmem:[%s4] sm:$0x1]
        %v662 = vunpack.c.l.b16 %v533
        %v663 = vunpack.c.l.b16 %v534
        %v664 = vunpack.c.l.b16 %v535
        %v665 = vunpack.c.l.b16 %v536
        %v666 = vunpack.c.l.b16 %v537
        %v667 = vunpack.c.l.b16 %v538
        %v668 = vunpack.c.l.b16 %v539
        %v669 = vunpack.c.l.b16 %v540
        %v670 = vunpack.c.l.b16 %v541
        %v671 = vunpack.c.l.b16 %v542
        %v672 = vunpack.c.l.b16 %v543
        %v673 = vunpack.c.l.b16 %v544
        %v674 = vunpack.c.l.b16 %v545
        %v675 = vunpack.c.l.b16 %v546
        %v676 = vunpack.c.l.b16 %v547
        %v677 = vunpack.c.l.b16 %v548
        %v678 = vunpack.c.l.b16 %v549
        %v679 = vunpack.c.l.b16 %v550
        %v680 = vunpack.c.l.b16 %v551
        %v681 = vunpack.c.l.b16 %v552
        %v682 = vunpack.c.l.b16 %v553
        %v683 = vunpack.c.l.b16 %v554
        %v684 = vunpack.c.l.b16 %v555
        %v685 = vunpack.c.l.b16 %v556
        %v686 = vunpack.c.l.b16 %v557
        %v687 = vunpack.c.l.b16 %v558
        %v688 = vunpack.c.l.b16 %v559
        %v689 = vunpack.c.l.b16 %v560
        %v690 = vunpack.c.l.b16 %v561
        %v691 = vunpack.c.l.b16 %v562
        %v692 = vunpack.c.l.b16 %v563
        %v693 = vunpack.c.l.b16 %v564
        %v694 = vunpack.c.l.b16 %v565
        %v695 = vunpack.c.l.b16 %v566
        %v696 = vunpack.c.l.b16 %v567
        %v697 = vunpack.c.l.b16 %v568
        %v698 = vunpack.c.l.b16 %v569
        %v699 = vunpack.c.l.b16 %v570
        %v700 = vunpack.c.l.b16 %v571
        %v701 = vunpack.c.l.b16 %v572
        %v702 = vunpack.c.l.b16 %v573
        %v703 = vunpack.c.l.b16 %v574
        %v704 = vunpack.c.l.b16 %v575
        %v705 = vunpack.c.l.b16 %v576
        %v706 = vunpack.c.l.b16 %v577
        %v707 = vunpack.c.l.b16 %v578
        %v708 = vunpack.c.l.b16 %v579
        %v709 = vunpack.c.l.b16 %v580
        %v710 = vunpack.c.l.b16 %v581
        %v711 = vunpack.c.l.b16 %v582
        %v712 = vunpack.c.l.b16 %v583
        %v713 = vunpack.c.l.b16 %v584
        %v714 = vunpack.c.l.b16 %v585
        %v715 = vunpack.c.l.b16 %v586
        %v716 = vunpack.c.l.b16 %v587
        %v717 = vunpack.c.l.b16 %v588
        %v718 = vunpack.c.l.b16 %v589
        %v719 = vunpack.c.l.b16 %v590
        %v720 = vunpack.c.l.b16 %v591
        %v721 = vunpack.c.l.b16 %v592
        %v722 = vunpack.c.l.b16 %v593
        %v723 = vunpack.c.l.b16 %v594
        %v724 = vunpack.c.l.b16 %v595
        %v725 = vunpack.c.l.b16 %v596
        %v726 = vpack.c.b16 %v663, %v662
        %v727 = vpack.c.b16 %v665, %v664
        %v728 = vpack.c.b16 %v667, %v666
        %v729 = vpack.c.b16 %v669, %v668
        %v730 = vpack.c.b16 %v671, %v670
        %v731 = vpack.c.b16 %v673, %v672
        %v732 = vpack.c.b16 %v675, %v674
        %v733 = vpack.c.b16 %v677, %v676
        %v734 = vpack.c.b16 %v679, %v678
        %v735 = vpack.c.b16 %v681, %v680
        %v736 = vpack.c.b16 %v683, %v682
        %v737 = vpack.c.b16 %v685, %v684
        %v738 = vpack.c.b16 %v687, %v686
        %v739 = vpack.c.b16 %v689, %v688
        %v740 = vpack.c.b16 %v691, %v690
        %v741 = vpack.c.b16 %v693, %v692
        %v742 = vpack.c.b16 %v695, %v694
        %v743 = vpack.c.b16 %v697, %v696
        %v744 = vpack.c.b16 %v699, %v698
        %v745 = vpack.c.b16 %v701, %v700
        %v746 = vpack.c.b16 %v703, %v702
        %v747 = vpack.c.b16 %v705, %v704
        %v748 = vpack.c.b16 %v707, %v706
        %v749 = vpack.c.b16 %v709, %v708
        %v750 = vpack.c.b16 %v711, %v710
        %v751 = vpack.c.b16 %v713, %v712
        %v752 = vpack.c.b16 %v715, %v714
        %v753 = vpack.c.b16 %v717, %v716
        %v754 = vpack.c.b16 %v719, %v718
        %v755 = vpack.c.b16 %v721, %v720
        %v756 = vpack.c.b16 %v723, %v722
        %v757 = vpack.c.b16 %v725, %v724
        %790 = vmatpush.bf16.msra.mxu0 %v733
        %791 = vmatpush.bf16.msra.mxu0 %v732
        %792 = vmatpush.bf16.msra.mxu0 %v731
        %793 = vmatpush.bf16.msra.mxu0 %v730
        %794 = vmatpush.bf16.msra.mxu0 %v729
        %795 = vmatpush.bf16.msra.mxu0 %v728
        %796 = vmatpush.bf16.msra.mxu0 %v727
        %797 = vmatpush.bf16.msra.mxu0 %v726
        %798 = vmatmul.bf16.gmra.mxu0 %v529
        %v799 = vpop.f32.mrf.mxu0
        %v800 = vadd.f32 %v597, %v799
        %v801 = vpop.f32.mrf.mxu0
        %802 = vdwg.mxu0
        %803 = vmatpush.bf16.msra.mxu0 %v741
        %804 = vmatpush.bf16.msra.mxu0 %v740
        %805 = vmatpush.bf16.msra.mxu0 %v739
        %806 = vmatpush.bf16.msra.mxu0 %v738
        %807 = vmatpush.bf16.msra.mxu0 %v737
        %808 = vmatpush.bf16.msra.mxu0 %v736
        %809 = vmatpush.bf16.msra.mxu0 %v735
        %810 = vmatpush.bf16.msra.mxu0 %v734
        %811 = vmatmul.bf16.gmra.mxu0 %v530
        %v812 = vpop.f32.mrf.mxu0
        %v813 = vadd.f32 %v800, %v812
        %v814 = vpop.f32.mrf.mxu0
        %815 = vdwg.mxu0
        %816 = vmatpush.bf16.msra.mxu0 %v749
        %817 = vmatpush.bf16.msra.mxu0 %v748
        %818 = vmatpush.bf16.msra.mxu0 %v747
        %819 = vmatpush.bf16.msra.mxu0 %v746
        %820 = vmatpush.bf16.msra.mxu0 %v745
        %821 = vmatpush.bf16.msra.mxu0 %v744
        %822 = vmatpush.bf16.msra.mxu0 %v743
        %823 = vmatpush.bf16.msra.mxu0 %v742
        %824 = vmatmul.bf16.gmra.mxu0 %v531
        %v825 = vpop.f32.mrf.mxu0
        %v826 = vadd.f32 %v813, %v825
        %v827 = vpop.f32.mrf.mxu0
        %828 = vdwg.mxu0
        %829 = vmatpush.bf16.msra.mxu0 %v757
        %830 = vmatpush.bf16.msra.mxu0 %v756
        %831 = vmatpush.bf16.msra.mxu0 %v755
        %832 = vmatpush.bf16.msra.mxu0 %v754
        %833 = vmatpush.bf16.msra.mxu0 %v753
        %834 = vmatpush.bf16.msra.mxu0 %v752
        %835 = vmatpush.bf16.msra.mxu0 %v751
        %836 = vmatpush.bf16.msra.mxu0 %v750
        %837 = vmatmul.bf16.gmra.mxu0 %v532
        %v838 = vpop.f32.mrf.mxu0
        %v839 = vadd.f32 %v826, %v838
        %v840 = vpop.f32.mrf.mxu0
        %841 = vdwg.mxu0
        %842 = vst [vmem:[%s217] sm:$0x1] %v839
        %s843 = sand.u32 %s137, 1
        %s844 = scalar_lea.sflag [#allocation3], %s843
        %s845 = sand.u32 %s137, 1
        %s846 = scalar_lea.vmem [#allocation2], %s845
        // Predicated region
        $region41: #{net_forward.1} parent=39 // pred_check
          %p847 = pneg %p147
        $region42: #{net_forward.1} parent=39 // pred_check_branch
          %849 = sbr.rel (%p847) target = $region44
        $region43: #{net_forward.1} parent=39 // pred_region
          %851 = vsyncadd %s844, 0
          %s852 = scalar_lea.hbm %s5, %s19
          %s854 = sshll.u32 %s846, 4
          %s855 = int_to_ptr.vmem [resolvable:$true] %s854
          %s856 = sshll.u32 %s852, 4
          %s857 = int_to_ptr.hbm [resolvable:$true] %s856
          %859 = dma.vmem_to_hbm [thread:$0]  %s855, 16, %s857, %s844
        $region44: #{net_forward.1} parent=39 // pred_fallthru
          _
      $region40: #{net_forward.1} parent=5 // pred_fallthru
        _
      %p860 = scmp.le.s32.totalorder 2, %s14
      // Predicated region
      $region45: #{net_forward.1} parent=5 // pred_check
        %p861 = pneg %p860
      $region46: #{net_forward.1} parent=5 // pred_check_branch
        %863 = sbr.rel (%p861) target = $region48
      $region47: #{net_forward.1} parent=5 // pred_region
        %s864 = ssub.s32 %s14, 2
        // Predicated region
        $region49: #{net_forward.1} parent=47 // pred_check
          %p865 = pneg %p153
        $region50: #{net_forward.1} parent=47 // pred_check_branch
          %867 = sbr.rel (%p865) target = $region52
        $region51: #{net_forward.1} parent=47 // pred_region
          %s868 = sand.u32 %s138, 1
          %s869 = scalar_lea.sflag [#allocation3], %s868
          %s870 = sand.u32 %s138, 1
          %s871 = scalar_lea.vmem [#allocation2], %s870
          %873 = dma.done %s869, 16
        $region52: #{net_forward.1} parent=47 // pred_fallthru
          _
      $region48: #{net_forward.1} parent=5 // pred_fallthru
        _
    $region6: #{net_forward.1} parent=1 // loop_footer
      %s18 = sadd.s32 1, %s14
    $region7: #{net_forward.1} parent=1 // loop_footer_branch
      %13 = sbr.rel target = $region3
    $region8: #{net_forward.1} parent=1 // loop_exit
      _
    %874 = vsyncpa [#allocation3], 1
    %s875 = scalar_lea.sflag [#allocation3], 1
    %876 = vsyncpa %s875, 1

</llo_original>
